<compile_context>
chip_gen: v5e
topology: v5e:2x2
jax: 0.10.0
libtpu: 0.0.40
codegen_flags: <defaults>
</compile_context>

<pallas_src>
import functools

import jax
import jax.numpy as jnp
import numpy as np
from jax import lax
from jax.experimental import pallas as pl
from jax.experimental.pallas import tpu as pltpu


def _residual_block_kernel(x_ref, w_ref, b_ref, gamma_ref, beta_ref,
                           o_ref, xcache_ref, ycache_ref, scale_ref, shift_ref,
                           *, kernel_size, pad, t_total, t_tile, n_t, mxu_dtype):
    # x_ref:     (1, C_in, T_tile)        current input tile (pass 0 only)
    # w_ref:     (K, C_out, C_in)         conv weight, pre-split per tap
    # b_ref:     (C_out, 1)               conv bias
    # gamma_ref/beta_ref: (1, C_out, 1)   precomputed CIN affine (per batch)
    # o_ref:     (1, C_half, T_tile)
    # xcache_ref: (n_t + 2, C_in, T_tile) x tiles; slots 0 / n_t+1 are zero halos
    # ycache_ref: (n_t, C_out, T_tile)    f32 conv output cache
    # scale_ref/shift_ref: (C_out, 1) f32 folded norm+affine coefficients
    p = pl.program_id(1)          # 0: stream x + conv into caches, 1: normalize/output
    ti = pl.program_id(2)

    K = kernel_size
    C_in = x_ref.shape[1]
    C_out = ycache_ref.shape[1]
    C_half = o_ref.shape[1]

    def conv_tile(tj):
        # Conv1d for output tile tj as K accumulated matmuls (no im2col concatenate).
        cur = xcache_ref[tj + 1]                               # (C_in, T_tile)
        if pad > 0:
            left = xcache_ref[tj][:, t_tile - pad:]            # left halo (zeros at tj==0)
            right = xcache_ref[tj + 2][:, :pad]                # right halo (zeros at last)
            frame = jnp.concatenate([left, cur, right], axis=-1)   # (C_in, T_tile + 2*pad)
        else:
            frame = cur
        acc = jnp.zeros((C_out, t_tile), jnp.float32)
        for k in range(K):
            xs = frame[:, k:k + t_tile]                        # (C_in, T_tile)
            wk = w_ref[k]                                      # (C_out, C_in)
            if mxu_dtype is not None:                          # optional bf16 MXU path
                xs = xs.astype(mxu_dtype)
                wk = wk.astype(mxu_dtype)
            acc = acc + jnp.dot(wk, xs, preferred_element_type=jnp.float32)
        ycache_ref[tj] = acc + b_ref[...].astype(jnp.float32)

    # ----------------------- pass 0: stream x, conv one tile behind -----------------------
    @pl.when(jnp.logical_and(p == 0, ti == 0))
    def _():
        # zero the halo slots once per batch (megacore-safe: no dependence on batch id)
        zeros_tile = jnp.zeros((C_in, t_tile), xcache_ref.dtype)
        xcache_ref[0] = zeros_tile
        xcache_ref[n_t + 1] = zeros_tile

    @pl.when(p == 0)
    def _():
        xcache_ref[ti + 1] = x_ref[0]                          # cache this tile (x read once)

        @pl.when(ti > 0)
        def _():
            conv_tile(ti - 1)                                  # lag by one tile (right halo ready)

        @pl.when(ti == n_t - 1)
        def _():
            conv_tile(n_t - 1)                                 # last tile uses the zero right halo

    # -------------- pass 1: centered stats once, then scale/shift + GLU + residual --------------
    @pl.when(jnp.logical_and(p == 1, ti == 0))
    def _():
        inv_n = jnp.float32(1.0 / t_total)

        def _sum_body(j, acc):
            return acc + jnp.sum(ycache_ref[j], axis=-1, keepdims=True)

        mean = lax.fori_loop(0, n_t, _sum_body,
                             jnp.zeros((C_out, 1), jnp.float32)) * inv_n

        def _var_body(j, acc):
            d = ycache_ref[j] - mean
            return acc + jnp.sum(d * d, axis=-1, keepdims=True)

        var = lax.fori_loop(0, n_t, _var_body,
                            jnp.zeros((C_out, 1), jnp.float32)) * inv_n
        inv_std = lax.rsqrt(var + 1e-8)
        gamma = gamma_ref[0].astype(jnp.float32)               # (C_out, 1)
        beta = beta_ref[0].astype(jnp.float32)
        scale = gamma * inv_std
        scale_ref[...] = scale
        shift_ref[...] = beta - mean * scale

    @pl.when(p == 1)
    def _():
        h = ycache_ref[ti] * scale_ref[...] + shift_ref[...]   # one FMA per element
        glu = h[:C_half, :] * jax.nn.sigmoid(h[C_half:, :])    # GLU over channel axis
        resid = xcache_ref[ti + 1].astype(jnp.float32)         # residual from the x cache
        o_ref[0] = (resid + glu).astype(o_ref.dtype)


def _choose_time_tile(T):
    for cand in (2048, 1024, 512, 256, 128):
        if T >= cand and T % cand == 0:
            return cand
    # ragged / tiny T: single full-T tile (VMEM budget is O(C*T) regardless of tile)
    return T


def residual_block(x, c, w_torch, b, wg, bg, wb, bb, *, padding,
                   t_tile=None, mxu_dtype=None):
    """x: (B, C_in, T), c: (B, S), w_torch: (C_out, C_in, K) (PyTorch Conv1d layout)."""
    B, C_in, T = x.shape
    C_out, C_in_w, K = w_torch.shape
    assert C_in_w == C_in
    assert C_out == 2 * C_in, "GLU + residual add requires dim_out == 2 * dim_in"
    assert 2 * padding == K - 1, "residual add requires a 'same' stride-1 conv"

    C_half = C_out // 2
    T_tile = t_tile if t_tile is not None else _choose_time_tile(T)
    assert T % T_tile == 0
    n_t = T // T_tile

    # --- wrapper-side glue ---
    # CIN affine hoisted out of the kernel (tiny S badly under-fills the MXU).
    gamma = (c @ wg.T + bg)[:, :, None]                        # (B, C_out, 1)
    beta = (c @ wb.T + bb)[:, :, None]                         # (B, C_out, 1)
    w_split = jnp.transpose(w_torch, (2, 0, 1))                # (K, C_out, C_in)
    b2 = b[:, None]                                            # (C_out, 1)

    kernel = functools.partial(
        _residual_block_kernel, kernel_size=K, pad=padding, t_total=T,
        t_tile=T_tile, n_t=n_t, mxu_dtype=mxu_dtype)

    # VMEM budget: caches + double-buffered I/O blocks + margin, capped per generation.
    itemsize_x = x.dtype.itemsize
    xcache_bytes = (n_t + 2) * C_in * T_tile * itemsize_x
    ycache_bytes = n_t * C_out * T_tile * 4
    io_bytes = 2 * (C_in * T_tile * itemsize_x
                    + C_half * T_tile * itemsize_x
                    + K * C_out * C_in * w_split.dtype.itemsize
                    + 4 * C_out * 4)
    needed = xcache_bytes + ycache_bytes + io_bytes + (16 << 20)
    try:
        vmem_cap = int(pltpu.get_tpu_info().vmem_capacity_bytes)
    except Exception:
        vmem_cap = 64 << 20
    vmem_limit = int(min(int(0.9 * vmem_cap), max(needed, 32 << 20)))

    return pl.pallas_call(
        kernel,
        out_shape=jax.ShapeDtypeStruct((B, C_half, T), x.dtype),
        grid_spec=pltpu.PrefetchScalarGridSpec(
            num_scalar_prefetch=0,
            grid=(B, 2, n_t),                                  # batch x {cache+conv, output} x tiles
            in_specs=[
                # pass 1 pins the last pass-0 block -> no pass-1 input DMA
                pl.BlockSpec((1, C_in, T_tile),
                             lambda bi, p, ti: (bi, 0, ti * (1 - p) + (n_t - 1) * p)),
                pl.BlockSpec((K, C_out, C_in), lambda bi, p, ti: (0, 0, 0)),
                pl.BlockSpec((C_out, 1), lambda bi, p, ti: (0, 0)),
                pl.BlockSpec((1, C_out, 1), lambda bi, p, ti: (bi, 0, 0)),
                pl.BlockSpec((1, C_out, 1), lambda bi, p, ti: (bi, 0, 0)),
            ],
            # pass 0 pins block (bi, 0, 0): nothing is written to HBM until pass 1
            out_specs=pl.BlockSpec((1, C_half, T_tile),
                                   lambda bi, p, ti: (bi, 0, ti * p)),
            scratch_shapes=[
                pltpu.VMEM((n_t + 2, C_in, T_tile), x.dtype),  # x cache (+ zero halo slots)
                pltpu.VMEM((n_t, C_out, T_tile), jnp.float32), # conv output cache
                pltpu.VMEM((C_out, 1), jnp.float32),           # folded scale
                pltpu.VMEM((C_out, 1), jnp.float32),           # folded shift
            ],
        ),
        compiler_params=pltpu.CompilerParams(
            dimension_semantics=("parallel", "arbitrary", "arbitrary"),
            vmem_limit_bytes=vmem_limit,
        ),
    )(x, w_split, b2, gamma, beta)


def reference(x, c, w_torch, b, wg, bg, wb, bb, padding):
    """Pure-JAX replica of the PyTorch forward for verification."""
    y = jax.lax.conv_general_dilated(
        x, w_torch, window_strides=(1,), padding=[(padding, padding)],
        dimension_numbers=('NCH', 'OIH', 'NCH')) + b[None, :, None]
    u = jnp.mean(y, axis=2, keepdims=True)
    var = jnp.mean((y - u) ** 2, axis=2, keepdims=True)
    std = jnp.sqrt(var + 1e-8)
    gamma = c @ wg.T + bg
    beta = c @ wb.T + bb
    h = (y - u) / std
    h = h * gamma[:, :, None] + beta[:, :, None]
    C_half = h.shape[1] // 2
    glu = h[:, :C_half] * jax.nn.sigmoid(h[:, C_half:])
    return x + glu


if __name__ == "__main__":
    def run_case(B, dim_in, T, K, padding, S, t_tile=None):
        dim_out = 2 * dim_in
        key = jax.random.PRNGKey(0)
        ks = jax.random.split(key, 8)
        x = jax.random.normal(ks[0], (B, dim_in, T), jnp.float32)
        c = jax.random.normal(ks[1], (B, S), jnp.float32)
        w_torch = jax.random.normal(ks[2], (dim_out, dim_in, K), jnp.float32) * 0.1
        b = jax.random.normal(ks[3], (dim_out,), jnp.float32) * 0.1
        wg = jax.random.normal(ks[4], (dim_out, S), jnp.float32) * 0.1
        bg = jax.random.normal(ks[5], (dim_out,), jnp.float32) * 0.1
        wb = jax.random.normal(ks[6], (dim_out, S), jnp.float32) * 0.1
        bb = jax.random.normal(ks[7], (dim_out,), jnp.float32) * 0.1

        out = residual_block(x, c, w_torch, b, wg, bg, wb, bb,
                             padding=padding, t_tile=t_tile)
        out = jax.block_until_ready(out)
        ref = reference(x, c, w_torch, b, wg, bg, wb, bb, padding)
        np.testing.assert_allclose(np.asarray(out), np.asarray(ref),
                                   rtol=1e-4, atol=1e-4)

    # single-tile path (matches the module's small test shape)
    run_case(B=2, dim_in=4, T=16, K=3, padding=1, S=4)
    # multi-tile path: exercises the lagged conv, halo slots and pinned pass-0 output block
    run_case(B=2, dim_in=4, T=256, K=5, padding=2, S=4, t_tile=128)
    print("KERNEL_OK")
</pallas_src>

<mosaic_0001>
module attributes {stable_mosaic.version = 11 : i64} {
  func.func @_residual_block_kernel(%arg0: i32, %arg1: i32, %arg2: i32, %arg3: memref<1x4x16xf32, #tpu.memory_space<vmem>>, %arg4: memref<3x8x4xf32, #tpu.memory_space<vmem>>, %arg5: memref<8x1xf32, #tpu.memory_space<vmem>>, %arg6: memref<1x8x1xf32, #tpu.memory_space<vmem>>, %arg7: memref<1x8x1xf32, #tpu.memory_space<vmem>>, %arg8: memref<1x4x16xf32, #tpu.memory_space<vmem>>, %arg9: memref<3x4x16xf32, #tpu.memory_space<vmem>>, %arg10: memref<1x8x16xf32, #tpu.memory_space<vmem>>, %arg11: memref<8x1xf32, #tpu.memory_space<vmem>>, %arg12: memref<8x1xf32, #tpu.memory_space<vmem>>) attributes {dimension_semantics = [#tpu.dimension_semantics<parallel>, #tpu.dimension_semantics<arbitrary>, #tpu.dimension_semantics<arbitrary>], iteration_bounds = array<i64: 2, 2, 1>, scalar_prefetch = 0 : i64, scratch_operands = 4 : i64, tpu.core_type = #tpu.core_type<tc>, window_params = [{transform_indices = @transform_0, window_bounds = array<i64: 1, 4, 16>}, {pipeline_mode = #tpu.pipeline_mode<synchronous>, transform_indices = @transform_1, window_bounds = array<i64: 3, 8, 4>}, {pipeline_mode = #tpu.pipeline_mode<synchronous>, transform_indices = @transform_2, window_bounds = array<i64: 8, 1>}, {transform_indices = @transform_3, window_bounds = array<i64: 1, 8, 1>}, {transform_indices = @transform_4, window_bounds = array<i64: 1, 8, 1>}, {transform_indices = @transform_5, window_bounds = array<i64: 1, 4, 16>}]} {
    %c0_i32 = arith.constant 0 : i32
    %0 = arith.cmpi eq, %arg1, %c0_i32 : i32
    %c0_i32_0 = arith.constant 0 : i32
    %1 = arith.cmpi eq, %arg2, %c0_i32_0 : i32
    %2 = arith.andi %0, %1 : i1
    %3 = arith.extui %2 : i1 to i32
    %c0_i32_1 = arith.constant 0 : i32
    %4 = arith.cmpi ne, %3, %c0_i32_1 : i32
    scf.if %4 {
      %cst = arith.constant 0.000000e+00 : f32
      %16 = vector.broadcast %cst : f32 to vector<4x16xf32>
      %c0 = arith.constant 0 : index
      %c0_8 = arith.constant 0 : index
      %c0_9 = arith.constant 0 : index
      %17 = vector.load %arg9[%c0, %c0_8, %c0_9] : memref<3x4x16xf32, #tpu.memory_space<vmem>>, vector<1x4x16xf32>
      %18 = vector.shape_cast %17 : vector<1x4x16xf32> to vector<4x16xf32>
      %19 = vector.shape_cast %16 : vector<4x16xf32> to vector<1x4x16xf32>
      tpu.vector_store %arg9[%c0, %c0_8, %c0_9], %19 {strides = array<i32>} : memref<3x4x16xf32, #tpu.memory_space<vmem>>, vector<1x4x16xf32>,
      %c2 = arith.constant 2 : index
      %c0_10 = arith.constant 0 : index
      %c0_11 = arith.constant 0 : index
      %20 = vector.load %arg9[%c2, %c0_10, %c0_11] : memref<3x4x16xf32, #tpu.memory_space<vmem>>, vector<1x4x16xf32>
      %21 = vector.shape_cast %20 : vector<1x4x16xf32> to vector<4x16xf32>
      %22 = vector.shape_cast %16 : vector<4x16xf32> to vector<1x4x16xf32>
      tpu.vector_store %arg9[%c2, %c0_10, %c0_11], %22 {strides = array<i32>} : memref<3x4x16xf32, #tpu.memory_space<vmem>>, vector<1x4x16xf32>,
    } else {
    }
    %c0_i32_2 = arith.constant 0 : i32
    %5 = arith.cmpi eq, %arg1, %c0_i32_2 : i32
    %6 = arith.extui %5 : i1 to i32
    %c0_i32_3 = arith.constant 0 : i32
    %7 = arith.cmpi ne, %6, %c0_i32_3 : i32
    scf.if %7 {
      %c0 = arith.constant 0 : index
      %c0_8 = arith.constant 0 : index
      %c0_9 = arith.constant 0 : index
      %16 = vector.load %arg3[%c0, %c0_8, %c0_9] : memref<1x4x16xf32, #tpu.memory_space<vmem>>, vector<1x4x16xf32>
      %17 = vector.shape_cast %16 : vector<1x4x16xf32> to vector<4x16xf32>
      %c1_i32_10 = arith.constant 1 : i32
      %18 = arith.addi %arg2, %c1_i32_10 : i32
      %19 = arith.index_cast %18 : i32 to index
      %c0_11 = arith.constant 0 : index
      %c0_12 = arith.constant 0 : index
      %20 = vector.load %arg9[%19, %c0_11, %c0_12] : memref<3x4x16xf32, #tpu.memory_space<vmem>>, vector<1x4x16xf32>
      %21 = vector.shape_cast %20 : vector<1x4x16xf32> to vector<4x16xf32>
      %22 = vector.shape_cast %17 : vector<4x16xf32> to vector<1x4x16xf32>
      tpu.vector_store %arg9[%19, %c0_11, %c0_12], %22 {strides = array<i32>} : memref<3x4x16xf32, #tpu.memory_space<vmem>>, vector<1x4x16xf32>,
      %c0_i32_13 = arith.constant 0 : i32
      %23 = arith.cmpi sgt, %arg2, %c0_i32_13 : i32
      %24 = arith.extui %23 : i1 to i32
      %c0_i32_14 = arith.constant 0 : i32
      %25 = arith.cmpi ne, %24, %c0_i32_14 : i32
      scf.if %25 {
        %c1_i32_17 = arith.constant 1 : i32
        %29 = arith.subi %arg2, %c1_i32_17 : i32
        %c1_i32_18 = arith.constant 1 : i32
        %30 = arith.addi %29, %c1_i32_18 : i32
        %31 = arith.index_cast %30 : i32 to index
        %c0_19 = arith.constant 0 : index
        %c0_20 = arith.constant 0 : index
        %32 = vector.load %arg9[%31, %c0_19, %c0_20] : memref<3x4x16xf32, #tpu.memory_space<vmem>>, vector<1x4x16xf32>
        %33 = vector.shape_cast %32 : vector<1x4x16xf32> to vector<4x16xf32>
        %34 = arith.index_cast %29 : i32 to index
        %c0_21 = arith.constant 0 : index
        %c0_22 = arith.constant 0 : index
        %35 = vector.load %arg9[%34, %c0_21, %c0_22] : memref<3x4x16xf32, #tpu.memory_space<vmem>>, vector<1x4x16xf32>
        %36 = vector.shape_cast %35 : vector<1x4x16xf32> to vector<4x16xf32>
        %37 = vector.extract_strided_slice %36 {offsets = [0, 15], sizes = [4, 1], strides = [1, 1]} : vector<4x16xf32> to vector<4x1xf32>
        %c2_i32 = arith.constant 2 : i32
        %38 = arith.addi %29, %c2_i32 : i32
        %39 = arith.index_cast %38 : i32 to index
        %c0_23 = arith.constant 0 : index
        %c0_24 = arith.constant 0 : index
        %40 = vector.load %arg9[%39, %c0_23, %c0_24] : memref<3x4x16xf32, #tpu.memory_space<vmem>>, vector<1x4x16xf32>
        %41 = vector.shape_cast %40 : vector<1x4x16xf32> to vector<4x16xf32>
        %42 = vector.extract_strided_slice %41 {offsets = [0, 0], sizes = [4, 1], strides = [1, 1]} : vector<4x16xf32> to vector<4x1xf32>
        %43 = tpu.concatenate %37, %33, %42 in 1 : vector<4x1xf32>, vector<4x16xf32>, vector<4x1xf32> -> vector<4x18xf32>
        %cst = arith.constant 0.000000e+00 : f32
        %44 = vector.broadcast %cst : f32 to vector<8x16xf32>
        %45 = vector.extract_strided_slice %43 {offsets = [0, 0], sizes = [4, 16], strides = [1, 1]} : vector<4x18xf32> to vector<4x16xf32>
        %c0_25 = arith.constant 0 : index
        %c0_26 = arith.constant 0 : index
        %c0_27 = arith.constant 0 : index
        %46 = vector.load %arg4[%c0_25, %c0_26, %c0_27] : memref<3x8x4xf32, #tpu.memory_space<vmem>>, vector<1x8x4xf32>
        %47 = vector.shape_cast %46 : vector<1x8x4xf32> to vector<8x4xf32>
        %cst_28 = arith.constant dense<0.000000e+00> : vector<8x16xf32>
        %48 = tpu.matmul %47, %45, %cst_28 {dimension_numbers = #tpu.dot_dimension_numbers<[1], [0], [0], [1], [0, 0, 1, 1], [], []>} : vector<8x4xf32>, vector<4x16xf32>, vector<8x16xf32> -> vector<8x16xf32>
        %49 = arith.addf %44, %48 : vector<8x16xf32>
        %50 = vector.extract_strided_slice %43 {offsets = [0, 1], sizes = [4, 16], strides = [1, 1]} : vector<4x18xf32> to vector<4x16xf32>
        %c1 = arith.constant 1 : index
        %c0_29 = arith.constant 0 : index
        %c0_30 = arith.constant 0 : index
        %51 = vector.load %arg4[%c1, %c0_29, %c0_30] : memref<3x8x4xf32, #tpu.memory_space<vmem>>, vector<1x8x4xf32>
        %52 = vector.shape_cast %51 : vector<1x8x4xf32> to vector<8x4xf32>
        %cst_31 = arith.constant dense<0.000000e+00> : vector<8x16xf32>
        %53 = tpu.matmul %52, %50, %cst_31 {dimension_numbers = #tpu.dot_dimension_numbers<[1], [0], [0], [1], [0, 0, 1, 1], [], []>} : vector<8x4xf32>, vector<4x16xf32>, vector<8x16xf32> -> vector<8x16xf32>
        %54 = arith.addf %49, %53 : vector<8x16xf32>
        %55 = vector.extract_strided_slice %43 {offsets = [0, 2], sizes = [4, 16], strides = [1, 1]} : vector<4x18xf32> to vector<4x16xf32>
        %c2 = arith.constant 2 : index
        %c0_32 = arith.constant 0 : index
        %c0_33 = arith.constant 0 : index
        %56 = vector.load %arg4[%c2, %c0_32, %c0_33] : memref<3x8x4xf32, #tpu.memory_space<vmem>>, vector<1x8x4xf32>
        %57 = vector.shape_cast %56 : vector<1x8x4xf32> to vector<8x4xf32>
        %cst_34 = arith.constant dense<0.000000e+00> : vector<8x16xf32>
        %58 = tpu.matmul %57, %55, %cst_34 {dimension_numbers = #tpu.dot_dimension_numbers<[1], [0], [0], [1], [0, 0, 1, 1], [], []>} : vector<8x4xf32>, vector<4x16xf32>, vector<8x16xf32> -> vector<8x16xf32>
        %59 = arith.addf %54, %58 : vector<8x16xf32>
        %c0_35 = arith.constant 0 : index
        %c0_36 = arith.constant 0 : index
        %60 = vector.load %arg5[%c0_35, %c0_36] : memref<8x1xf32, #tpu.memory_space<vmem>>, vector<8x1xf32>
        %61 = vector.broadcast %60 : vector<8x1xf32> to vector<8x16xf32>
        %62 = arith.addf %59, %61 : vector<8x16xf32>
        %63 = arith.index_cast %29 : i32 to index
        %c0_37 = arith.constant 0 : index
        %c0_38 = arith.constant 0 : index
        %64 = vector.load %arg10[%63, %c0_37, %c0_38] : memref<1x8x16xf32, #tpu.memory_space<vmem>>, vector<1x8x16xf32>
        %65 = vector.shape_cast %64 : vector<1x8x16xf32> to vector<8x16xf32>
        %66 = vector.shape_cast %62 : vector<8x16xf32> to vector<1x8x16xf32>
        tpu.vector_store %arg10[%63, %c0_37, %c0_38], %66 {strides = array<i32>} : memref<1x8x16xf32, #tpu.memory_space<vmem>>, vector<1x8x16xf32>,
      } else {
      }
      %c0_i32_15 = arith.constant 0 : i32
      %26 = arith.cmpi eq, %arg2, %c0_i32_15 : i32
      %27 = arith.extui %26 : i1 to i32
      %c0_i32_16 = arith.constant 0 : i32
      %28 = arith.cmpi ne, %27, %c0_i32_16 : i32
      scf.if %28 {
        %c1 = arith.constant 1 : index
        %c0_17 = arith.constant 0 : index
        %c0_18 = arith.constant 0 : index
        %29 = vector.load %arg9[%c1, %c0_17, %c0_18] : memref<3x4x16xf32, #tpu.memory_space<vmem>>, vector<1x4x16xf32>
        %30 = vector.shape_cast %29 : vector<1x4x16xf32> to vector<4x16xf32>
        %c0_19 = arith.constant 0 : index
        %c0_20 = arith.constant 0 : index
        %c0_21 = arith.constant 0 : index
        %31 = vector.load %arg9[%c0_19, %c0_20, %c0_21] : memref<3x4x16xf32, #tpu.memory_space<vmem>>, vector<1x4x16xf32>
        %32 = vector.shape_cast %31 : vector<1x4x16xf32> to vector<4x16xf32>
        %33 = vector.extract_strided_slice %32 {offsets = [0, 15], sizes = [4, 1], strides = [1, 1]} : vector<4x16xf32> to vector<4x1xf32>
        %c2 = arith.constant 2 : index
        %c0_22 = arith.constant 0 : index
        %c0_23 = arith.constant 0 : index
        %34 = vector.load %arg9[%c2, %c0_22, %c0_23] : memref<3x4x16xf32, #tpu.memory_space<vmem>>, vector<1x4x16xf32>
        %35 = vector.shape_cast %34 : vector<1x4x16xf32> to vector<4x16xf32>
        %36 = vector.extract_strided_slice %35 {offsets = [0, 0], sizes = [4, 1], strides = [1, 1]} : vector<4x16xf32> to vector<4x1xf32>
        %37 = tpu.concatenate %33, %30, %36 in 1 : vector<4x1xf32>, vector<4x16xf32>, vector<4x1xf32> -> vector<4x18xf32>
        %cst = arith.constant 0.000000e+00 : f32
        %38 = vector.broadcast %cst : f32 to vector<8x16xf32>
        %39 = vector.extract_strided_slice %37 {offsets = [0, 0], sizes = [4, 16], strides = [1, 1]} : vector<4x18xf32> to vector<4x16xf32>
        %c0_24 = arith.constant 0 : index
        %c0_25 = arith.constant 0 : index
        %c0_26 = arith.constant 0 : index
        %40 = vector.load %arg4[%c0_24, %c0_25, %c0_26] : memref<3x8x4xf32, #tpu.memory_space<vmem>>, vector<1x8x4xf32>
        %41 = vector.shape_cast %40 : vector<1x8x4xf32> to vector<8x4xf32>
        %cst_27 = arith.constant dense<0.000000e+00> : vector<8x16xf32>
        %42 = tpu.matmul %41, %39, %cst_27 {dimension_numbers = #tpu.dot_dimension_numbers<[1], [0], [0], [1], [0, 0, 1, 1], [], []>} : vector<8x4xf32>, vector<4x16xf32>, vector<8x16xf32> -> vector<8x16xf32>
        %43 = arith.addf %38, %42 : vector<8x16xf32>
        %44 = vector.extract_strided_slice %37 {offsets = [0, 1], sizes = [4, 16], strides = [1, 1]} : vector<4x18xf32> to vector<4x16xf32>
        %c1_28 = arith.constant 1 : index
        %c0_29 = arith.constant 0 : index
        %c0_30 = arith.constant 0 : index
        %45 = vector.load %arg4[%c1_28, %c0_29, %c0_30] : memref<3x8x4xf32, #tpu.memory_space<vmem>>, vector<1x8x4xf32>
        %46 = vector.shape_cast %45 : vector<1x8x4xf32> to vector<8x4xf32>
        %cst_31 = arith.constant dense<0.000000e+00> : vector<8x16xf32>
        %47 = tpu.matmul %46, %44, %cst_31 {dimension_numbers = #tpu.dot_dimension_numbers<[1], [0], [0], [1], [0, 0, 1, 1], [], []>} : vector<8x4xf32>, vector<4x16xf32>, vector<8x16xf32> -> vector<8x16xf32>
        %48 = arith.addf %43, %47 : vector<8x16xf32>
        %49 = vector.extract_strided_slice %37 {offsets = [0, 2], sizes = [4, 16], strides = [1, 1]} : vector<4x18xf32> to vector<4x16xf32>
        %c2_32 = arith.constant 2 : index
        %c0_33 = arith.constant 0 : index
        %c0_34 = arith.constant 0 : index
        %50 = vector.load %arg4[%c2_32, %c0_33, %c0_34] : memref<3x8x4xf32, #tpu.memory_space<vmem>>, vector<1x8x4xf32>
        %51 = vector.shape_cast %50 : vector<1x8x4xf32> to vector<8x4xf32>
        %cst_35 = arith.constant dense<0.000000e+00> : vector<8x16xf32>
        %52 = tpu.matmul %51, %49, %cst_35 {dimension_numbers = #tpu.dot_dimension_numbers<[1], [0], [0], [1], [0, 0, 1, 1], [], []>} : vector<8x4xf32>, vector<4x16xf32>, vector<8x16xf32> -> vector<8x16xf32>
        %53 = arith.addf %48, %52 : vector<8x16xf32>
        %c0_36 = arith.constant 0 : index
        %c0_37 = arith.constant 0 : index
        %54 = vector.load %arg5[%c0_36, %c0_37] : memref<8x1xf32, #tpu.memory_space<vmem>>, vector<8x1xf32>
        %55 = vector.broadcast %54 : vector<8x1xf32> to vector<8x16xf32>
        %56 = arith.addf %53, %55 : vector<8x16xf32>
        %c0_38 = arith.constant 0 : index
        %c0_39 = arith.constant 0 : index
        %c0_40 = arith.constant 0 : index
        %57 = vector.load %arg10[%c0_38, %c0_39, %c0_40] : memref<1x8x16xf32, #tpu.memory_space<vmem>>, vector<1x8x16xf32>
        %58 = vector.shape_cast %57 : vector<1x8x16xf32> to vector<8x16xf32>
        %59 = vector.shape_cast %56 : vector<8x16xf32> to vector<1x8x16xf32>
        tpu.vector_store %arg10[%c0_38, %c0_39, %c0_40], %59 {strides = array<i32>} : memref<1x8x16xf32, #tpu.memory_space<vmem>>, vector<1x8x16xf32>,
      } else {
      }
    } else {
    }
    %c1_i32 = arith.constant 1 : i32
    %8 = arith.cmpi eq, %arg1, %c1_i32 : i32
    %c0_i32_4 = arith.constant 0 : i32
    %9 = arith.cmpi eq, %arg2, %c0_i32_4 : i32
    %10 = arith.andi %8, %9 : i1
    %11 = arith.extui %10 : i1 to i32
    %c0_i32_5 = arith.constant 0 : i32
    %12 = arith.cmpi ne, %11, %c0_i32_5 : i32
    scf.if %12 {
      %cst = arith.constant 0.000000e+00 : f32
      %16 = vector.broadcast %cst : f32 to vector<8x1xf32>
      %c0_i32_8 = arith.constant 0 : i32
      %17 = arith.index_cast %c0_i32_8 : i32 to index
      %c0 = arith.constant 0 : index
      %c0_9 = arith.constant 0 : index
      %18 = vector.load %arg10[%17, %c0, %c0_9] : memref<1x8x16xf32, #tpu.memory_space<vmem>>, vector<1x8x16xf32>
      %19 = vector.shape_cast %18 : vector<1x8x16xf32> to vector<8x16xf32>
      %cst_10 = arith.constant dense<0.000000e+00> : vector<8xf32>
      %20 = vector.multi_reduction <add>, %19, %cst_10 [1] : vector<8x16xf32> to vector<8xf32>
      %21 = vector.shape_cast %20 : vector<8xf32> to vector<8x1xf32>
      %22 = arith.addf %16, %21 : vector<8x1xf32>
      %c1_i32_11 = arith.constant 1 : i32
      %cst_12 = arith.constant 6.250000e-02 : f32
      %23 = vector.broadcast %cst_12 : f32 to vector<8x1xf32>
      %24 = arith.mulf %22, %23 : vector<8x1xf32>
      %cst_13 = arith.constant 0.000000e+00 : f32
      %25 = vector.broadcast %cst_13 : f32 to vector<8x1xf32>
      %c0_i32_14 = arith.constant 0 : i32
      %26 = arith.index_cast %c0_i32_14 : i32 to index
      %c0_15 = arith.constant 0 : index
      %c0_16 = arith.constant 0 : index
      %27 = vector.load %arg10[%26, %c0_15, %c0_16] : memref<1x8x16xf32, #tpu.memory_space<vmem>>, vector<1x8x16xf32>
      %28 = vector.shape_cast %27 : vector<1x8x16xf32> to vector<8x16xf32>
      %29 = vector.broadcast %24 : vector<8x1xf32> to vector<8x16xf32>
      %30 = arith.subf %28, %29 : vector<8x16xf32>
      %31 = arith.mulf %30, %30 : vector<8x16xf32>
      %cst_17 = arith.constant dense<0.000000e+00> : vector<8xf32>
      %32 = vector.multi_reduction <add>, %31, %cst_17 [1] : vector<8x16xf32> to vector<8xf32>
      %33 = vector.shape_cast %32 : vector<8xf32> to vector<8x1xf32>
      %34 = arith.addf %25, %33 : vector<8x1xf32>
      %c1_i32_18 = arith.constant 1 : i32
      %cst_19 = arith.constant 6.250000e-02 : f32
      %35 = vector.broadcast %cst_19 : f32 to vector<8x1xf32>
      %36 = arith.mulf %34, %35 : vector<8x1xf32>
      %cst_20 = arith.constant 9.99999993E-9 : f32
      %37 = vector.broadcast %cst_20 : f32 to vector<8x1xf32>
      %38 = arith.addf %36, %37 : vector<8x1xf32>
      %39 = math.rsqrt %38 : vector<8x1xf32>
      %c0_21 = arith.constant 0 : index
      %c0_22 = arith.constant 0 : index
      %c0_23 = arith.constant 0 : index
      %40 = vector.load %arg6[%c0_21, %c0_22, %c0_23] : memref<1x8x1xf32, #tpu.memory_space<vmem>>, vector<1x8x1xf32>
      %41 = vector.shape_cast %40 : vector<1x8x1xf32> to vector<8x1xf32>
      %c0_24 = arith.constant 0 : index
      %c0_25 = arith.constant 0 : index
      %c0_26 = arith.constant 0 : index
      %42 = vector.load %arg7[%c0_24, %c0_25, %c0_26] : memref<1x8x1xf32, #tpu.memory_space<vmem>>, vector<1x8x1xf32>
      %43 = vector.shape_cast %42 : vector<1x8x1xf32> to vector<8x1xf32>
      %44 = arith.mulf %41, %39 : vector<8x1xf32>
      %c0_27 = arith.constant 0 : index
      %c0_28 = arith.constant 0 : index
      %45 = vector.load %arg11[%c0_27, %c0_28] : memref<8x1xf32, #tpu.memory_space<vmem>>, vector<8x1xf32>
      tpu.vector_store %arg11[%c0_27, %c0_28], %44 {strides = array<i32>} : memref<8x1xf32, #tpu.memory_space<vmem>>, vector<8x1xf32>,
      %46 = arith.mulf %24, %44 : vector<8x1xf32>
      %47 = arith.subf %43, %46 : vector<8x1xf32>
      %c0_29 = arith.constant 0 : index
      %c0_30 = arith.constant 0 : index
      %48 = vector.load %arg12[%c0_29, %c0_30] : memref<8x1xf32, #tpu.memory_space<vmem>>, vector<8x1xf32>
      tpu.vector_store %arg12[%c0_29, %c0_30], %47 {strides = array<i32>} : memref<8x1xf32, #tpu.memory_space<vmem>>, vector<8x1xf32>,
    } else {
    }
    %c1_i32_6 = arith.constant 1 : i32
    %13 = arith.cmpi eq, %arg1, %c1_i32_6 : i32
    %14 = arith.extui %13 : i1 to i32
    %c0_i32_7 = arith.constant 0 : i32
    %15 = arith.cmpi ne, %14, %c0_i32_7 : i32
    scf.if %15 {
      %16 = arith.index_cast %arg2 : i32 to index
      %c0 = arith.constant 0 : index
      %c0_8 = arith.constant 0 : index
      %17 = vector.load %arg10[%16, %c0, %c0_8] : memref<1x8x16xf32, #tpu.memory_space<vmem>>, vector<1x8x16xf32>
      %18 = vector.shape_cast %17 : vector<1x8x16xf32> to vector<8x16xf32>
      %c0_9 = arith.constant 0 : index
      %c0_10 = arith.constant 0 : index
      %19 = vector.load %arg11[%c0_9, %c0_10] : memref<8x1xf32, #tpu.memory_space<vmem>>, vector<8x1xf32>
      %20 = vector.broadcast %19 : vector<8x1xf32> to vector<8x16xf32>
      %21 = arith.mulf %18, %20 : vector<8x16xf32>
      %c0_11 = arith.constant 0 : index
      %c0_12 = arith.constant 0 : index
      %22 = vector.load %arg12[%c0_11, %c0_12] : memref<8x1xf32, #tpu.memory_space<vmem>>, vector<8x1xf32>
      %23 = vector.broadcast %22 : vector<8x1xf32> to vector<8x16xf32>
      %24 = arith.addf %21, %23 : vector<8x16xf32>
      %25 = vector.extract_strided_slice %24 {offsets = [0, 0], sizes = [4, 16], strides = [1, 1]} : vector<8x16xf32> to vector<4x16xf32>
      %26 = vector.extract_strided_slice %24 {offsets = [4, 0], sizes = [4, 16], strides = [1, 1]} : vector<8x16xf32> to vector<4x16xf32>
      %27 = arith.negf %26 : vector<4x16xf32>
      %28 = math.exp %27 : vector<4x16xf32>
      %cst = arith.constant 1.000000e+00 : f32
      %29 = vector.broadcast %cst : f32 to vector<4x16xf32>
      %30 = arith.addf %29, %28 : vector<4x16xf32>
      %31 = arith.divf %29, %30 : vector<4x16xf32>
      %32 = arith.mulf %25, %31 : vector<4x16xf32>
      %c1_i32_13 = arith.constant 1 : i32
      %33 = arith.addi %arg2, %c1_i32_13 : i32
      %34 = arith.index_cast %33 : i32 to index
      %c0_14 = arith.constant 0 : index
      %c0_15 = arith.constant 0 : index
      %35 = vector.load %arg9[%34, %c0_14, %c0_15] : memref<3x4x16xf32, #tpu.memory_space<vmem>>, vector<1x4x16xf32>
      %36 = vector.shape_cast %35 : vector<1x4x16xf32> to vector<4x16xf32>
      %37 = arith.addf %36, %32 : vector<4x16xf32>
      %c0_16 = arith.constant 0 : index
      %c0_17 = arith.constant 0 : index
      %c0_18 = arith.constant 0 : index
      %38 = vector.load %arg8[%c0_16, %c0_17, %c0_18] : memref<1x4x16xf32, #tpu.memory_space<vmem>>, vector<1x4x16xf32>
      %39 = vector.shape_cast %38 : vector<1x4x16xf32> to vector<4x16xf32>
      %40 = vector.shape_cast %37 : vector<4x16xf32> to vector<1x4x16xf32>
      tpu.vector_store %arg8[%c0_16, %c0_17, %c0_18], %40 {strides = array<i32>} : memref<1x4x16xf32, #tpu.memory_space<vmem>>, vector<1x4x16xf32>,
    } else {
    }
    return
  }
  func.func @transform_0(%arg0: i32, %arg1: i32, %arg2: i32) -> (i32, i32, i32) {
    %c1_i32 = arith.constant 1 : i32
    %0 = arith.subi %c1_i32, %arg1 : i32
    %1 = arith.muli %arg2, %0 : i32
    %c0_i32 = arith.constant 0 : i32
    %2 = arith.muli %c0_i32, %arg1 : i32
    %3 = arith.addi %1, %2 : i32
    %c0_i32_0 = arith.constant 0 : i32
    %c0_i32_1 = arith.constant 0 : i32
    return %arg0, %c0_i32_0, %3 : i32, i32, i32
  }
  func.func @transform_1(%arg0: i32, %arg1: i32, %arg2: i32) -> (i32, i32, i32) {
    %c0_i32 = arith.constant 0 : i32
    %c0_i32_0 = arith.constant 0 : i32
    %c0_i32_1 = arith.constant 0 : i32
    %c0_i32_2 = arith.constant 0 : i32
    return %c0_i32, %c0_i32_0, %c0_i32_1 : i32, i32, i32
  }
  func.func @transform_2(%arg0: i32, %arg1: i32, %arg2: i32) -> (i32, i32) {
    %c0_i32 = arith.constant 0 : i32
    %c0_i32_0 = arith.constant 0 : i32
    %c0_i32_1 = arith.constant 0 : i32
    return %c0_i32, %c0_i32_0 : i32, i32
  }
  func.func @transform_3(%arg0: i32, %arg1: i32, %arg2: i32) -> (i32, i32, i32) {
    %c0_i32 = arith.constant 0 : i32
    %c0_i32_0 = arith.constant 0 : i32
    %c0_i32_1 = arith.constant 0 : i32
    return %arg0, %c0_i32, %c0_i32_0 : i32, i32, i32
  }
  func.func @transform_4(%arg0: i32, %arg1: i32, %arg2: i32) -> (i32, i32, i32) {
    %c0_i32 = arith.constant 0 : i32
    %c0_i32_0 = arith.constant 0 : i32
    %c0_i32_1 = arith.constant 0 : i32
    return %arg0, %c0_i32, %c0_i32_0 : i32, i32, i32
  }
  func.func @transform_5(%arg0: i32, %arg1: i32, %arg2: i32) -> (i32, i32, i32) {
    %0 = arith.muli %arg2, %arg1 : i32
    %c0_i32 = arith.constant 0 : i32
    %c0_i32_0 = arith.constant 0 : i32
    return %arg0, %c0_i32, %0 : i32, i32, i32
  }
}

</mosaic_0001>

<llo_original>
// kernel: tpu_custom_call.1
$region0: #{tpu_custom_call.1}
  #allocation0 [shape = 'u32[]', space=smem, size = 0x4, offset = 0x4, fixed_abs, tag = 'smem constant byte address 0x4 - core index']
  #allocation1 [shape = 'u32[72,128]{1,0:T(1,128)}', space=vmem, size = 0x9000, scoped, tag = 'internal scratch']
  #allocation2 [shape = 'f32[3,4,16]{2,1,0:T(4,128)}', space=vmem, size = 0x1800, scoped, tag = 'scratch operand']
  #allocation3 [shape = 'f32[1,8,16]{2,1,0:T(8,128)}', space=vmem, size = 0x1000, scoped, tag = 'scratch operand']
  #allocation4 [shape = 'f32[8,1]{1,0:T(8,128)}', space=vmem, size = 0x1000, scoped, tag = 'scratch operand']
  #allocation5 [shape = 'f32[8,1]{1,0:T(8,128)}', space=vmem, size = 0x1000, scoped, tag = 'scratch operand']
  %s0 = inlined_call_operand.vmem [shape: f32[2,4,16], index: 0, kind: input, shape index: {}]
  %s1 = inlined_call_operand.vmem [shape: f32[3,8,4], index: 1, kind: input, shape index: {}]
  %s2 = inlined_call_operand.vmem [shape: f32[8,1], index: 2, kind: input, shape index: {}]
  %s3 = inlined_call_operand.vmem [shape: f32[2,8,1], index: 3, kind: input, shape index: {}]
  %s4 = inlined_call_operand.vmem [shape: f32[2,8,1], index: 4, kind: input, shape index: {}]
  %s5 = inlined_call_operand.hbm [shape: f32[2,4,16], index: 5, kind: output, shape index: {}]
  %s6 = sld [smem:[#allocation0]]
  $region77: #{tpu_custom_call.1} parent=0
    _
  %s8 = ssub.s32 1, %s6
  %s9 = scalar_select 0, %s8, %s6
  $region1: #{tpu_custom_call.1} parent=0
    #allocation6 [shape = 'u8[4096]{0}', space=vmem, size = 0x1000, scoped, tag = 'output window, operand 0']
    #allocation7 [shape = 's32[2]{0}', space=sflag, size = 0x8, scoped, tag = 'scoped memory for tpu_custom_call.1']
    %10 = vsyncpa [#allocation7], 0
    %s11 = scalar_lea.sflag [#allocation7], 1
    %12 = vsyncpa %s11, 0
    loop: start=0, step=1, limit=6
    $region2: #{tpu_custom_call.1} parent=1 // loop_pre_header
      _
    $region3: #{tpu_custom_call.1} parent=1 // loop_header
      %s14 = sphi 0, %s18
      %p15 = scmp.ge.s32.totalorder %s14, 6
      %s21 = sphi 0, %s40
      %s22 = sphi 0, %s36
      %s23 = sphi 0, %s32
      %s24 = sphi 0, %s21
      %s25 = sphi 0, %s22
      %s26 = sphi 0, %s23
      %s27 = sphi 0, %s24
      %s28 = sphi 0, %s25
      %s29 = sphi 0, %s26
      %s49 = sphi 0, %s51
      %s52 = sphi 0, %s49
      %s53 = sphi 0, %s52
      %s69 = sphi 0, %s53
      %s73 = sphi 0, %s73
      %s75 = sphi 0, %s73
      %s76 = sphi 0, %s75
      %s90 = sphi 0, %s76
      %s94 = sphi 0, %s94
      %s96 = sphi 0, %s94
      %s97 = sphi 0, %s96
      %s111 = sphi 0, %s97
      %s117 = sphi 0, %s119
      %s120 = sphi 0, %s117
      %s121 = sphi 0, %s120
      %s137 = sphi 0, %s121
      %s143 = sphi 0, %s145
      %s146 = sphi 0, %s143
      %s147 = sphi 0, %s146
      %s163 = sphi 0, %s147
      %s173 = sphi 0, %s175
      %s176 = sphi 0, %s173
      %s177 = sphi 0, %s176
      %s193 = sphi 0, %s177
    $region4: #{tpu_custom_call.1} parent=1 // loop_header_branch
      %17 = sbr.rel (%p15) target = $region8
    $region5: #{tpu_custom_call.1} parent=1 // loop_body
      %s19 = ssub.s32 %s14, 1
      %s20 = ssub.s32 %s14, 2
      %s30 = sadd.s32 1, %s23
      %p31 = scmp.ge.s32.totalorder %s30, 1
      %s32 = scalar_select %p31, 0, %s30
      %s33 = sadd.s32 1, %s22
      %s34 = scalar_select %p31, %s33, %s22
      %p35 = scmp.ge.s32.totalorder %s34, 2
      %s36 = scalar_select %p35, 0, %s34
      %s37 = sadd.s32 1, %s21
      %s38 = scalar_select %p35, %s37, %s21
      %p39 = scmp.ge.s32.totalorder %s38, 2
      %s40 = scalar_select %p39, 0, %s38
      %s41 = ssub.s32 1, %s22
      %s42 = smul.u32 %s23, %s41
      %s43 = ssub.s32 1, %s36
      %s44 = smul.u32 %s32, %s43
      %s45 = ssub.s32 %s21, %s40
      %s46 = ssub.s32 %s42, %s44
      %s47 = sor.u32 %s45, %s46
      %p48 = scmp.eq.s32.totalorder %s47, 0
      %s50 = sadd.s32 %s49, 1
      %s51 = scalar_select %p48, %s49, %s50
      %p54 = pneg %p48
      %p55 = scmp.eq.s32.totalorder %s14, 3
      %p56 = por %p54, %p55
      %p57 = scmp.ne.s32.totalorder %s49, %s52
      %p58 = scmp.eq.s32.totalorder %s14, 0
      %p59 = por %p57, %p58
      %p60 = scmp.ne.s32.totalorder %s49, %s52
      %p61 = scmp.eq.s32.totalorder %s19, 3
      %p62 = por %p60, %p61
      %p63 = scmp.ne.s32.totalorder %s52, %s53
      %p64 = scmp.eq.s32.totalorder %s19, 0
      %p65 = por %p63, %p64
      %p66 = scmp.ne.s32.totalorder %s52, %s53
      %p67 = scmp.eq.s32.totalorder %s20, 3
      %p68 = por %p66, %p67
      %p70 = scmp.ne.s32.totalorder %s53, %s69
      %p71 = scmp.eq.s32.totalorder %s20, 0
      %p72 = por %p70, %p71
      %s74 = sadd.s32 %s73, 1
      %p77 = scmp.eq.s32.totalorder %s14, 3
      %p78 = scmp.ne.s32.totalorder %s73, %s75
      %p79 = scmp.eq.s32.totalorder %s14, 0
      %p80 = por %p78, %p79
      %p81 = scmp.ne.s32.totalorder %s73, %s75
      %p82 = scmp.eq.s32.totalorder %s19, 3
      %p83 = por %p81, %p82
      %p84 = scmp.ne.s32.totalorder %s75, %s76
      %p85 = scmp.eq.s32.totalorder %s19, 0
      %p86 = por %p84, %p85
      %p87 = scmp.ne.s32.totalorder %s75, %s76
      %p88 = scmp.eq.s32.totalorder %s20, 3
      %p89 = por %p87, %p88
      %p91 = scmp.ne.s32.totalorder %s76, %s90
      %p92 = scmp.eq.s32.totalorder %s20, 0
      %p93 = por %p91, %p92
      %s95 = sadd.s32 %s94, 1
      %p98 = scmp.eq.s32.totalorder %s14, 3
      %p99 = scmp.ne.s32.totalorder %s94, %s96
      %p100 = scmp.eq.s32.totalorder %s14, 0
      %p101 = por %p99, %p100
      %p102 = scmp.ne.s32.totalorder %s94, %s96
      %p103 = scmp.eq.s32.totalorder %s19, 3
      %p104 = por %p102, %p103
      %p105 = scmp.ne.s32.totalorder %s96, %s97
      %p106 = scmp.eq.s32.totalorder %s19, 0
      %p107 = por %p105, %p106
      %p108 = scmp.ne.s32.totalorder %s96, %s97
      %p109 = scmp.eq.s32.totalorder %s20, 3
      %p110 = por %p108, %p109
      %p112 = scmp.ne.s32.totalorder %s97, %s111
      %p113 = scmp.eq.s32.totalorder %s20, 0
      %p114 = por %p112, %p113
      %s115 = ssub.s32 %s21, %s40
      %p116 = scmp.eq.s32.totalorder %s115, 0
      %s118 = sadd.s32 %s117, 1
      %s119 = scalar_select %p116, %s117, %s118
      %p122 = pneg %p116
      %p123 = scmp.eq.s32.totalorder %s14, 3
      %p124 = por %p122, %p123
      %p125 = scmp.ne.s32.totalorder %s117, %s120
      %p126 = scmp.eq.s32.totalorder %s14, 0
      %p127 = por %p125, %p126
      %p128 = scmp.ne.s32.totalorder %s117, %s120
      %p129 = scmp.eq.s32.totalorder %s19, 3
      %p130 = por %p128, %p129
      %p131 = scmp.ne.s32.totalorder %s120, %s121
      %p132 = scmp.eq.s32.totalorder %s19, 0
      %p133 = por %p131, %p132
      %p134 = scmp.ne.s32.totalorder %s120, %s121
      %p135 = scmp.eq.s32.totalorder %s20, 3
      %p136 = por %p134, %p135
      %p138 = scmp.ne.s32.totalorder %s121, %s137
      %p139 = scmp.eq.s32.totalorder %s20, 0
      %p140 = por %p138, %p139
      %s141 = ssub.s32 %s21, %s40
      %p142 = scmp.eq.s32.totalorder %s141, 0
      %s144 = sadd.s32 %s143, 1
      %s145 = scalar_select %p142, %s143, %s144
      %p148 = pneg %p142
      %p149 = scmp.eq.s32.totalorder %s14, 3
      %p150 = por %p148, %p149
      %p151 = scmp.ne.s32.totalorder %s143, %s146
      %p152 = scmp.eq.s32.totalorder %s14, 0
      %p153 = por %p151, %p152
      %p154 = scmp.ne.s32.totalorder %s143, %s146
      %p155 = scmp.eq.s32.totalorder %s19, 3
      %p156 = por %p154, %p155
      %p157 = scmp.ne.s32.totalorder %s146, %s147
      %p158 = scmp.eq.s32.totalorder %s19, 0
      %p159 = por %p157, %p158
      %p160 = scmp.ne.s32.totalorder %s146, %s147
      %p161 = scmp.eq.s32.totalorder %s20, 3
      %p162 = por %p160, %p161
      %p164 = scmp.ne.s32.totalorder %s147, %s163
      %p165 = scmp.eq.s32.totalorder %s20, 0
      %p166 = por %p164, %p165
      %s167 = smul.u32 %s23, %s22
      %s168 = smul.u32 %s32, %s36
      %s169 = ssub.s32 %s21, %s40
      %s170 = ssub.s32 %s167, %s168
      %s171 = sor.u32 %s169, %s170
      %p172 = scmp.eq.s32.totalorder %s171, 0
      %s174 = sadd.s32 %s173, 1
      %s175 = scalar_select %p172, %s173, %s174
      %p178 = pneg %p172
      %p179 = scmp.eq.s32.totalorder %s14, 3
      %p180 = por %p178, %p179
      %p181 = scmp.ne.s32.totalorder %s173, %s176
      %p182 = scmp.eq.s32.totalorder %s14, 0
      %p183 = por %p181, %p182
      %p184 = scmp.ne.s32.totalorder %s173, %s176
      %p185 = scmp.eq.s32.totalorder %s19, 3
      %p186 = por %p184, %p185
      %p187 = scmp.ne.s32.totalorder %s176, %s177
      %p188 = scmp.eq.s32.totalorder %s19, 0
      %p189 = por %p187, %p188
      %p190 = scmp.ne.s32.totalorder %s176, %s177
      %p191 = scmp.eq.s32.totalorder %s20, 3
      %p192 = por %p190, %p191
      %p194 = scmp.ne.s32.totalorder %s177, %s193
      %p195 = scmp.eq.s32.totalorder %s20, 0
      %p196 = por %p194, %p195
      %p197 = scmp.le.s32.totalorder 1, %s14
      %p198 = scmp.lt.s32.totalorder %s14, 5
      %p199 = pnand %p197, %p198
      %p200 = pneg %p199
      // Predicated region
      $region9: #{tpu_custom_call.1} parent=5 // pred_check
        _
      $region10: #{tpu_custom_call.1} parent=5 // pred_check_branch
        %202 = sbr.rel (%p199) target = $region12
      $region11: #{tpu_custom_call.1} parent=5 // pred_region
        %s203 = ssub.s32 %s14, 1
        // Predicated region
        $region13: #{tpu_custom_call.1} parent=11 // pred_check
          %p204 = pneg %p86
        $region14: #{tpu_custom_call.1} parent=11 // pred_check_branch
          %206 = sbr.rel (%p204) target = $region16
        $region15: #{tpu_custom_call.1} parent=11 // pred_region
          _
        $region16: #{tpu_custom_call.1} parent=11 // pred_fallthru
          _
        // Predicated region
        $region17: #{tpu_custom_call.1} parent=11 // pred_check
          %p207 = pneg %p107
        $region18: #{tpu_custom_call.1} parent=11 // pred_check_branch
          %209 = sbr.rel (%p207) target = $region20
        $region19: #{tpu_custom_call.1} parent=11 // pred_region
          _
        $region20: #{tpu_custom_call.1} parent=11 // pred_fallthru
          _
      $region12: #{tpu_custom_call.1} parent=5 // pred_fallthru
        _
      %p210 = scmp.lt.s32.totalorder %s14, 4
      // Predicated region
      $region21: #{tpu_custom_call.1} parent=5 // pred_check
        %p211 = pneg %p210
      $region22: #{tpu_custom_call.1} parent=5 // pred_check_branch
        %213 = sbr.rel (%p211) target = $region24
      $region23: #{tpu_custom_call.1} parent=5 // pred_region
        // Predicated region
        $region25: #{tpu_custom_call.1} parent=23 // pred_check
          %p214 = pneg %p59
        $region26: #{tpu_custom_call.1} parent=23 // pred_check_branch
          %216 = sbr.rel (%p214) target = $region28
        $region27: #{tpu_custom_call.1} parent=23 // pred_region
          %s217 = ssub.s32 1, %s22
          %s218 = smul.u32 %s23, %s217
          %p219 = scmp.lt.s32.totalorder %s21, 1
          %s220 = scalar_select %p219, %s21, 1
          %p221 = scmp.lt.s32.totalorder %s218, 0
          %s222 = scalar_select %p221, %s218, 0
          %s223 = sadd.s32 %s222, %s220
          %s224 = smul.addr %s223, 4
          %s225 = scalar_lea.vmem %s0, %s224
          %s226 = ssub.s32 1, %s22
          %s227 = smul.u32 %s23, %s226
        $region28: #{tpu_custom_call.1} parent=23 // pred_fallthru
          _
        // Predicated region
        $region29: #{tpu_custom_call.1} parent=23 // pred_check
          %p228 = pneg %p127
        $region30: #{tpu_custom_call.1} parent=23 // pred_check_branch
          %230 = sbr.rel (%p228) target = $region32
        $region31: #{tpu_custom_call.1} parent=23 // pred_region
          %p231 = scmp.lt.s32.totalorder %s21, 1
          %s232 = scalar_select %p231, %s21, 1
          %s233 = smul.addr %s232, 8
          %s234 = scalar_lea.vmem %s3, %s233
        $region32: #{tpu_custom_call.1} parent=23 // pred_fallthru
          _
        // Predicated region
        $region33: #{tpu_custom_call.1} parent=23 // pred_check
          %p235 = pneg %p153
        $region34: #{tpu_custom_call.1} parent=23 // pred_check_branch
          %237 = sbr.rel (%p235) target = $region36
        $region35: #{tpu_custom_call.1} parent=23 // pred_region
          %p238 = scmp.lt.s32.totalorder %s21, 1
          %s239 = scalar_select %p238, %s21, 1
          %s240 = smul.addr %s239, 8
          %s241 = scalar_lea.vmem %s4, %s240
        $region36: #{tpu_custom_call.1} parent=23 // pred_fallthru
          _
      $region24: #{tpu_custom_call.1} parent=5 // pred_fallthru
        _
      %p242 = scmp.le.s32.totalorder 1, %s14
      %p243 = scmp.lt.s32.totalorder %s14, 5
      %p244 = pnand %p242, %p243
      %p245 = pneg %p244
      // Predicated region
      $region37: #{tpu_custom_call.1} parent=5 // pred_check
        _
      $region38: #{tpu_custom_call.1} parent=5 // pred_check_branch
        %247 = sbr.rel (%p244) target = $region40
      $region39: #{tpu_custom_call.1} parent=5 // pred_region
        %s248 = ssub.s32 %s14, 1
        %s249 = ssub.s32 1, %s25
        %s250 = smul.u32 %s26, %s249
        %p251 = scmp.lt.s32.totalorder %s24, 1
        %s252 = scalar_select %p251, %s24, 1
        %p253 = scmp.lt.s32.totalorder %s250, 0
        %s254 = scalar_select %p253, %s250, 0
        %s255 = sadd.s32 %s254, %s252
        %s256 = smul.addr %s255, 4
        %s257 = scalar_lea.vmem %s0, %s256
        %p258 = pneg %p65
        %p259 = pneg %p62
        %p260 = pneg %p86
        %p261 = pneg %p83
        %p262 = pneg %p107
        %p263 = pneg %p104
        %p264 = scmp.lt.s32.totalorder %s24, 1
        %s265 = scalar_select %p264, %s24, 1
        %s266 = smul.addr %s265, 8
        %s267 = scalar_lea.vmem %s3, %s266
        %p268 = pneg %p133
        %p269 = pneg %p130
        %p270 = scmp.lt.s32.totalorder %s24, 1
        %s271 = scalar_select %p270, %s24, 1
        %s272 = smul.addr %s271, 8
        %s273 = scalar_lea.vmem %s4, %s272
        %p274 = pneg %p159
        %p275 = pneg %p156
        %p276 = pneg %p189
        %p277 = pneg %p186
        %s278 = sand.u32 %s176, 1
        %s279 = scalar_lea.sflag [#allocation7], %s278
        %s280 = sand.u32 %s176, 1
        %s281 = smul.addr %s280, 4
        %s282 = scalar_lea.vmem [#allocation6], %s281
        %s283 = ssub.s32 1, %s25
        %s284 = smul.u32 %s26, %s283
        %p285 = scmp.lt.s32.totalorder %s24, 1
        %s286 = scalar_select %p285, %s24, 1
        %p287 = scmp.lt.s32.totalorder %s284, 0
        %s288 = scalar_select %p287, %s284, 0
        %s289 = sadd.s32 %s288, %s286
        %s290 = smul.addr %s289, 4
        %s291 = scalar_lea.vmem %s0, %s290
        %s292 = ssub.s32 1, %s25
        %s293 = smul.u32 %s26, %s292
        %p294 = scmp.lt.s32.totalorder %s24, 1
        %s295 = scalar_select %p294, %s24, 1
        %s296 = smul.addr %s295, 8
        %s297 = scalar_lea.vmem %s3, %s296
        %p298 = scmp.lt.s32.totalorder %s24, 1
        %s299 = scalar_select %p298, %s24, 1
        %s300 = smul.addr %s299, 8
        %s301 = scalar_lea.vmem %s4, %s300
        %s302 = smul.u32 %s26, %s25
        %p303 = scmp.eq.s32.totalorder %s25, 0
        %p304 = scmp.eq.s32.totalorder %s26, 0
        %p305 = pnand %p303, %p304
        %p306 = pneg %p305
        // Predicated region
        $region41: #{tpu_custom_call.1} parent=39 // pred_check
          _
        $region42: #{tpu_custom_call.1} parent=39 // pred_check_branch
          %308 = sbr.rel (%p305) target = $region44
        $region43: #{tpu_custom_call.1} parent=39 // pred_region
          %vm309 = vcmask 125952
          %310 = vst.msk [vmem:[#allocation2] sm:$0xf] %vm309, 0.0
          %s311 = scalar_lea.vmem [#allocation2], 8
          %312 = vst.msk [vmem:[%s311] sm:$0xf] %vm309, 0.0
        $region44: #{tpu_custom_call.1} parent=39 // pred_fallthru
          _
        // Predicated region
        $region45: #{tpu_custom_call.1} parent=39 // pred_check
          %p313 = pneg %p303
        $region46: #{tpu_custom_call.1} parent=39 // pred_check_branch
          %315 = sbr.rel (%p313) target = $region48
        $region47: #{tpu_custom_call.1} parent=39 // pred_region
          %v316 = vld [vmem:[%s291] sm:$0xf]
          %s317 = sadd.s32 %s26, 1
          %s318 = smul.u32 %s317, 4
          %s319 = scalar_lea.vmem [#allocation2], %s318
          %vm320 = vcmask 125952
          %321 = vst.msk [vmem:[%s319] sm:$0xf] %vm320, %v316
          %p322 = scmp.gt.s32.totalorder %s26, 0
          // Predicated region
          $region49: #{tpu_custom_call.1} parent=47 // pred_check
            %p323 = pneg %p322
          $region50: #{tpu_custom_call.1} parent=47 // pred_check_branch
            %325 = sbr.rel (%p323) target = $region52
          $region51: #{tpu_custom_call.1} parent=47 // pred_region
            %s326 = ssub.s32 %s26, 1
            %s327 = smul.u32 %s26, 4
            %s328 = scalar_lea.vmem [#allocation2], %s327
            %v329 = vld [vmem:[%s328] sm:$0xf]
            %s330 = smul.u32 %s326, 4
            %s331 = scalar_lea.vmem [#allocation2], %s330
            %v332 = vld [vmem:[%s331] sm:$0xf]
            %v333 = vld [vmem:[%s319] sm:$0xf]
            %335 = vrot.lane.b32.xlu0 %v332, 113
            %v336 = vpop.permute.xlu0 %335
            %339 = vrot.lane.b32.xlu0 %v329, 1
            %v340 = vpop.permute.xlu0 %339
            %343 = vrot.lane.b32.xlu0 %v333, 17
            %v344 = vpop.permute.xlu0 %343
            %vm346 = vcmask 7168
            %v347 = vsel %vm346, %v336, %v340
            %vm348 = vcmask 138240
            %v349 = vsel %vm348, %v347, %v344
            %v350 = vld [vmem:[%s1] sm:$0xff]
            %s351 = scalar_lea.vmem %s1, 8
            %v352 = vld [vmem:[%s351] sm:$0xff]
            %354 = vrot.lane.b32.xlu0 %v349, 127
            %v355 = vpop.permute.xlu0 %354
            %vm356 = vcmask 31744
            %v358 = vsel %vm356, %v352, 0
            %vm360 = vcmask 1043456
            %v361 = vsel %vm360, %v355, 0
            %363 = vmatpush.msra.mxu0 0.0
            %364 = vmatpush.msra.mxu0 0.0
            %365 = vmatpush.msra.mxu0 0.0
            %366 = vmatpush.msra.mxu0 0.0
            %367 = vmatpush.msra.mxu0 0.0
            %368 = vmatpush.msra.mxu0 0.0
            %369 = vmatpush.msra.mxu0 0.0
            %370 = vmatpush.msra.mxu0 0.0
            %371 = vmatpush.msra.mxu0 0.0
            %372 = vmatpush.msra.mxu0 0.0
            %373 = vmatpush.msra.mxu0 0.0
            %374 = vmatpush.msra.mxu0 0.0
            %375 = vmatpush.msra.mxu0 0.0
            %376 = vmatpush.msra.mxu0 0.0
            %377 = vmatpush.msra.mxu0 0.0
            %378 = vmatpush.msra.mxu0 %v361
            %379 = vmatmul.f32.gmra.mxu0 %v358
            %v380 = vpop.f32.mrf.mxu0
            %v381 = vadd.f32 0.0, %v380
            %382 = vdwg.mxu0
            %v384 = vsel %vm356, %v350, 0
            %v386 = vsel %vm360, %v349, 0
            %388 = vmatpush.msra.mxu0 0.0
            %389 = vmatpush.msra.mxu0 0.0
            %390 = vmatpush.msra.mxu0 0.0
            %391 = vmatpush.msra.mxu0 0.0
            %392 = vmatpush.msra.mxu0 0.0
            %393 = vmatpush.msra.mxu0 0.0
            %394 = vmatpush.msra.mxu0 0.0
            %395 = vmatpush.msra.mxu0 0.0
            %396 = vmatpush.msra.mxu0 0.0
            %397 = vmatpush.msra.mxu0 0.0
            %398 = vmatpush.msra.mxu0 0.0
            %399 = vmatpush.msra.mxu0 0.0
            %400 = vmatpush.msra.mxu0 0.0
            %401 = vmatpush.msra.mxu0 0.0
            %402 = vmatpush.msra.mxu0 0.0
            %403 = vmatpush.msra.mxu0 %v386
            %404 = vmatmul.f32.gmra.mxu0 %v384
            %v405 = vpop.f32.mrf.mxu0
            %v406 = vadd.f32 %v381, %v405
            %407 = vdwg.mxu0
            %s408 = scalar_lea.vmem %s1, 16
            %v409 = vld [vmem:[%s408] sm:$0xff]
            %410 = vrot.lane.b32.xlu0 %v349, 126
            %v411 = vpop.permute.xlu0 %410
            %v413 = vsel %vm356, %v409, 0
            %v415 = vsel %vm360, %v411, 0
            %417 = vmatpush.msra.mxu0 0.0
            %418 = vmatpush.msra.mxu0 0.0
            %419 = vmatpush.msra.mxu0 0.0
            %420 = vmatpush.msra.mxu0 0.0
            %421 = vmatpush.msra.mxu0 0.0
            %422 = vmatpush.msra.mxu0 0.0
            %423 = vmatpush.msra.mxu0 0.0
            %424 = vmatpush.msra.mxu0 0.0
            %425 = vmatpush.msra.mxu0 0.0
            %426 = vmatpush.msra.mxu0 0.0
            %427 = vmatpush.msra.mxu0 0.0
            %428 = vmatpush.msra.mxu0 0.0
            %429 = vmatpush.msra.mxu0 0.0
            %430 = vmatpush.msra.mxu0 0.0
            %431 = vmatpush.msra.mxu0 0.0
            %432 = vmatpush.msra.mxu0 %v415
            %433 = vmatmul.f32.gmra.mxu0 %v413
            %v434 = vpop.f32.mrf.mxu0
            %v435 = vadd.f32 0.0, %v434
            %436 = vdwg.mxu0
            %v437 = vadd.f32 %v406, %v435
            %v438 = vld [vmem:[%s2] sm:$0xff]
            %440 = vset.pattern.permute.xlu0 0
            %441 = vperm.xlu0 %440, %v438
            %v442 = vpop.permute.xlu0 %441
            %v444 = vadd.f32 %v437, %v442
            %s445 = smul.u32 %s326, 8
            %s446 = scalar_lea.vmem [#allocation3], %s445
            %vm447 = vcmask 130048
            %448 = vst.msk [vmem:[%s446] sm:$0xff] %vm447, %v444
          $region52: #{tpu_custom_call.1} parent=47 // pred_fallthru
            _
          // Predicated region
          $region53: #{tpu_custom_call.1} parent=47 // pred_check
            %p449 = pneg %p304
          $region54: #{tpu_custom_call.1} parent=47 // pred_check_branch
            %451 = sbr.rel (%p449) target = $region56
          $region55: #{tpu_custom_call.1} parent=47 // pred_region
            %s452 = scalar_lea.vmem [#allocation2], 4
            %v453 = vld [vmem:[%s452] sm:$0xf]
            %v454 = vld [vmem:[#allocation2] sm:$0xf]
            %s455 = scalar_lea.vmem [#allocation2], 8
            %v456 = vld [vmem:[%s455] sm:$0xf]
            %458 = vrot.lane.b32.xlu0 %v454, 113
            %v459 = vpop.permute.xlu0 %458
            %462 = vrot.lane.b32.xlu0 %v453, 1
            %v463 = vpop.permute.xlu0 %462
            %466 = vrot.lane.b32.xlu0 %v456, 17
            %v467 = vpop.permute.xlu0 %466
            %vm469 = vcmask 7168
            %v470 = vsel %vm469, %v459, %v463
            %vm471 = vcmask 138240
            %v472 = vsel %vm471, %v470, %v467
            %v473 = vld [vmem:[%s1] sm:$0xff]
            %s474 = scalar_lea.vmem %s1, 8
            %v475 = vld [vmem:[%s474] sm:$0xff]
            %477 = vrot.lane.b32.xlu0 %v472, 127
            %v478 = vpop.permute.xlu0 %477
            %vm479 = vcmask 31744
            %v481 = vsel %vm479, %v475, 0
            %vm483 = vcmask 1043456
            %v484 = vsel %vm483, %v478, 0
            %486 = vmatpush.msra.mxu0 0.0
            %487 = vmatpush.msra.mxu0 0.0
            %488 = vmatpush.msra.mxu0 0.0
            %489 = vmatpush.msra.mxu0 0.0
            %490 = vmatpush.msra.mxu0 0.0
            %491 = vmatpush.msra.mxu0 0.0
            %492 = vmatpush.msra.mxu0 0.0
            %493 = vmatpush.msra.mxu0 0.0
            %494 = vmatpush.msra.mxu0 0.0
            %495 = vmatpush.msra.mxu0 0.0
            %496 = vmatpush.msra.mxu0 0.0
            %497 = vmatpush.msra.mxu0 0.0
            %498 = vmatpush.msra.mxu0 0.0
            %499 = vmatpush.msra.mxu0 0.0
            %500 = vmatpush.msra.mxu0 0.0
            %501 = vmatpush.msra.mxu0 %v484
            %502 = vmatmul.f32.gmra.mxu0 %v481
            %v503 = vpop.f32.mrf.mxu0
            %v504 = vadd.f32 0.0, %v503
            %505 = vdwg.mxu0
            %v507 = vsel %vm479, %v473, 0
            %v509 = vsel %vm483, %v472, 0
            %511 = vmatpush.msra.mxu0 0.0
            %512 = vmatpush.msra.mxu0 0.0
            %513 = vmatpush.msra.mxu0 0.0
            %514 = vmatpush.msra.mxu0 0.0
            %515 = vmatpush.msra.mxu0 0.0
            %516 = vmatpush.msra.mxu0 0.0
            %517 = vmatpush.msra.mxu0 0.0
            %518 = vmatpush.msra.mxu0 0.0
            %519 = vmatpush.msra.mxu0 0.0
            %520 = vmatpush.msra.mxu0 0.0
            %521 = vmatpush.msra.mxu0 0.0
            %522 = vmatpush.msra.mxu0 0.0
            %523 = vmatpush.msra.mxu0 0.0
            %524 = vmatpush.msra.mxu0 0.0
            %525 = vmatpush.msra.mxu0 0.0
            %526 = vmatpush.msra.mxu0 %v509
            %527 = vmatmul.f32.gmra.mxu0 %v507
            %v528 = vpop.f32.mrf.mxu0
            %v529 = vadd.f32 %v504, %v528
            %530 = vdwg.mxu0
            %s531 = scalar_lea.vmem %s1, 16
            %v532 = vld [vmem:[%s531] sm:$0xff]
            %533 = vrot.lane.b32.xlu0 %v472, 126
            %v534 = vpop.permute.xlu0 %533
            %v536 = vsel %vm479, %v532, 0
            %v538 = vsel %vm483, %v534, 0
            %540 = vmatpush.msra.mxu0 0.0
            %541 = vmatpush.msra.mxu0 0.0
            %542 = vmatpush.msra.mxu0 0.0
            %543 = vmatpush.msra.mxu0 0.0
            %544 = vmatpush.msra.mxu0 0.0
            %545 = vmatpush.msra.mxu0 0.0
            %546 = vmatpush.msra.mxu0 0.0
            %547 = vmatpush.msra.mxu0 0.0
            %548 = vmatpush.msra.mxu0 0.0
            %549 = vmatpush.msra.mxu0 0.0
            %550 = vmatpush.msra.mxu0 0.0
            %551 = vmatpush.msra.mxu0 0.0
            %552 = vmatpush.msra.mxu0 0.0
            %553 = vmatpush.msra.mxu0 0.0
            %554 = vmatpush.msra.mxu0 0.0
            %555 = vmatpush.msra.mxu0 %v538
            %556 = vmatmul.f32.gmra.mxu0 %v536
            %v557 = vpop.f32.mrf.mxu0
            %v558 = vadd.f32 0.0, %v557
            %559 = vdwg.mxu0
            %v560 = vadd.f32 %v529, %v558
            %v561 = vld [vmem:[%s2] sm:$0xff]
            %563 = vset.pattern.permute.xlu0 0
            %564 = vperm.xlu0 %563, %v561
            %v565 = vpop.permute.xlu0 %564
            %v567 = vadd.f32 %v560, %v565
            %vm568 = vcmask 130048
            %569 = vst.msk [vmem:[#allocation3] sm:$0xff] %vm568, %v567
          $region56: #{tpu_custom_call.1} parent=47 // pred_fallthru
            _
        $region48: #{tpu_custom_call.1} parent=39 // pred_fallthru
          _
        %p570 = scmp.eq.s32.totalorder %s25, 1
        %p571 = pnand %p570, %p304
        %p572 = pneg %p571
        // Predicated region
        $region57: #{tpu_custom_call.1} parent=39 // pred_check
          _
        $region58: #{tpu_custom_call.1} parent=39 // pred_check_branch
          %574 = sbr.rel (%p571) target = $region60
        $region59: #{tpu_custom_call.1} parent=39 // pred_region
          %v575 = vld [vmem:[#allocation3] sm:$0xff]
          %vm576 = vcmask 130048
          %v577 = vsel %vm576, %v575, 0.0
          %578 = vadd.xlane.f32.xlu0 %v577
          %v579 = vpop.xlane.xlu0 %578
          %v580 = vadd.f32 %v579, 0.0
          %v581 = vmul.f32 %v580, 0.0625
          %v582 = vsub.f32 %v575, %v581
          %v583 = vmul.f32 %v582, %v582
          %v584 = vsel %vm576, %v583, 0.0
          %585 = vadd.xlane.f32.xlu0 %v584
          %v586 = vpop.xlane.xlu0 %585
          %v587 = vadd.f32 %v586, 0.0
          %v588 = vmul.f32 %v587, 0.0625
          %v589 = vadd.f32 %v588, 1e-08
          %v590 = vrsqrt.pop %v589
          %v591 = vmul.f32 %v590, %v589
          %v592 = vmul.f32 %v591, %v590
          %v593 = vmul.f32 0.5, %v592
          %v594 = vsub.f32 1.5, %v593
          %v595 = vmul.f32 %v590, %v594
          %vm596 = vweird.f32 %v589
          %vm597 = vweird.f32 %v590
          %vm598 = vmor %vm596, %vm597
          %v599 = vsel %vm598, %v590, %v595
          %v600 = vld [vmem:[%s297] sm:$0xff]
          %v601 = vld [vmem:[%s301] sm:$0xff]
          %v602 = vmul.f32 %v600, %v599
          %vm603 = vcmask 7168
          %604 = vst.msk [vmem:[#allocation4] sm:$0xff] %vm603, %v602
          %v605 = vmul.f32 %v581, %v602
          %v606 = vsub.f32 %v601, %v605
          %607 = vst.msk [vmem:[#allocation5] sm:$0xff] %vm603, %v606
        $region60: #{tpu_custom_call.1} parent=39 // pred_fallthru
          _
        // Predicated region
        $region61: #{tpu_custom_call.1} parent=39 // pred_check
          %p608 = pneg %p570
        $region62: #{tpu_custom_call.1} parent=39 // pred_check_branch
          %610 = sbr.rel (%p608) target = $region64
        $region63: #{tpu_custom_call.1} parent=39 // pred_region
          %s611 = smul.u32 %s26, 8
          %s612 = scalar_lea.vmem [#allocation3], %s611
          %v613 = vld [vmem:[%s612] sm:$0xff]
          %v614 = vld [vmem:[#allocation4] sm:$0xff]
          %616 = vset.pattern.permute.xlu0 0
          %617 = vperm.xlu0 %616, %v614
          %v618 = vpop.permute.xlu0 %617
          %v620 = vmul.f32 %v613, %v618
          %v621 = vld [vmem:[#allocation5] sm:$0xff]
          %623 = vset.pattern.permute.xlu0 0
          %624 = vperm.xlu0 %623, %v621
          %v625 = vpop.permute.xlu0 %624
          %v627 = vadd.f32 %v620, %v625
          %v628 = vxor.u32 %v627, 2147483648
          %v629 = vmul.f32 %v628, 1.442695
          %v630 = vpow.pop %v629
          %v631 = vadd.f32 %v630, 1.0
          %v632 = vrcp.pop %v631
          %v633 = vmul.f32 %v631, %v632
          %v634 = vsub.f32 1.0, %v633
          %v635 = vmul.f32 %v632, %v634
          %v636 = vadd.f32 %v632, %v635
          %vm637 = vweird.f32 %v631
          %vm638 = vweird.f32 %v632
          %vm639 = vmor %vm637, %vm638
          %v640 = vsel %vm639, %v632, %v636
          %v641 = vand.u32 2147483647, %v631
          %vm642 = vcmp.eq.f32.partialorder %v641, 8.507059e+37
          %v643 = vand.u32 %v631, 2147483648
          %v644 = vor.u32 1.1754944e-38, %v643
          %v645 = vsel %vm642, %v644, %v640
          %v646 = vmul.f32 1.0, %v645
          %v648 = vrot.slane %v646, 4
          %v650 = vmul.f32 %v627, %v648
          %s651 = sadd.s32 %s26, 1
          %s652 = smul.u32 %s651, 4
          %s653 = scalar_lea.vmem [#allocation2], %s652
          %v654 = vld [vmem:[%s653] sm:$0xf]
          %v655 = vadd.f32 %v654, %v650
          %vm656 = vcmask 125952
          %657 = vst.msk [vmem:[%s282] sm:$0xf] %vm656, %v655
        $region64: #{tpu_custom_call.1} parent=39 // pred_fallthru
          _
        %s658 = sand.u32 %s176, 1
        %s659 = scalar_lea.sflag [#allocation7], %s658
        %s660 = sand.u32 %s176, 1
        %s661 = smul.addr %s660, 4
        %s662 = scalar_lea.vmem [#allocation6], %s661
        // Predicated region
        $region65: #{tpu_custom_call.1} parent=39 // pred_check
          %p663 = pneg %p186
        $region66: #{tpu_custom_call.1} parent=39 // pred_check_branch
          %665 = sbr.rel (%p663) target = $region68
        $region67: #{tpu_custom_call.1} parent=39 // pred_region
          %s666 = smul.u32 %s26, %s25
          %668 = vsyncadd %s659, 0
          %s669 = sadd.s32 %s666, %s24
          %s670 = smul.addr %s669, 4
          %s671 = scalar_lea.hbm %s5, %s670
          %s673 = sshll.u32 %s662, 4
          %s674 = int_to_ptr.vmem [resolvable:$true] %s673
          %s675 = sshll.u32 %s671, 4
          %s676 = int_to_ptr.hbm [resolvable:$true] %s675
          %678 = dma.vmem_to_hbm [thread:$0]  %s674, 64, %s676, %s659
        $region68: #{tpu_custom_call.1} parent=39 // pred_fallthru
          _
      $region40: #{tpu_custom_call.1} parent=5 // pred_fallthru
        _
      %p679 = scmp.le.s32.totalorder 2, %s14
      // Predicated region
      $region69: #{tpu_custom_call.1} parent=5 // pred_check
        %p680 = pneg %p679
      $region70: #{tpu_custom_call.1} parent=5 // pred_check_branch
        %682 = sbr.rel (%p680) target = $region72
      $region71: #{tpu_custom_call.1} parent=5 // pred_region
        %s683 = ssub.s32 %s14, 2
        // Predicated region
        $region73: #{tpu_custom_call.1} parent=71 // pred_check
          %p684 = pneg %p192
        $region74: #{tpu_custom_call.1} parent=71 // pred_check_branch
          %686 = sbr.rel (%p684) target = $region76
        $region75: #{tpu_custom_call.1} parent=71 // pred_region
          %s687 = sand.u32 %s177, 1
          %s688 = scalar_lea.sflag [#allocation7], %s687
          %s689 = sand.u32 %s177, 1
          %s690 = smul.addr %s689, 4
          %s691 = scalar_lea.vmem [#allocation6], %s690
          %693 = dma.done %s688, 64
        $region76: #{tpu_custom_call.1} parent=71 // pred_fallthru
          _
      $region72: #{tpu_custom_call.1} parent=5 // pred_fallthru
        _
    $region6: #{tpu_custom_call.1} parent=1 // loop_footer
      %s18 = sadd.s32 1, %s14
    $region7: #{tpu_custom_call.1} parent=1 // loop_footer_branch
      %13 = sbr.rel target = $region3
    $region8: #{tpu_custom_call.1} parent=1 // loop_exit
      _
    %694 = vsyncpa [#allocation7], 1
    %s695 = scalar_lea.sflag [#allocation7], 1
    %696 = vsyncpa %s695, 1

</llo_original>
